<compile_context>
chip_gen: v6e
topology: v6e:2x2x1
jax: 0.10.0
libtpu: 0.0.40
codegen_flags: <defaults>
</compile_context>

<pallas_src>
import jax
import jax.numpy as jnp
from jax import lax
from jax.experimental import pallas as pl
from jax.experimental.pallas import tpu as pltpu

_EPS = 1e-12
_LANES = 128
_OUT_SUBLANES = 8


def _round_up(x, m):
    return -(-x // m) * m


def _default_budgets():
    """(target_block_bytes, vmem_limit_bytes) chosen per TPU generation."""
    try:
        vmem_cap = pltpu.get_tpu_info().vmem_capacity_bytes
    except Exception:
        vmem_cap = 64 * 1024 * 1024  # conservative: assume v7x-sized VMEM
    if vmem_cap >= 100 * 1024 * 1024:      # v5e / v6e: 128 MiB physical VMEM
        return 16 * 1024 * 1024, 64 * 1024 * 1024
    else:                                   # v7x: 64 MiB per TensorCore
        return 12 * 1024 * 1024, 48 * 1024 * 1024


def _pick_batch_tile(M, B, C, itemsize, target_block_bytes, vmem_limit_bytes):
    """Sublane-aligned batch tile honoring the block and VMEM budgets."""
    sublane_mult = max(8, 32 // itemsize)        # f32:8, bf16:16, int8/fp8:32
    c_pad = _round_up(C, _LANES)                 # lanes are padded in VMEM
    in_row = M * c_pad * itemsize                # one batch row of the input block
    work_row = 6 * c_pad * 4                     # f32 temporaries (logits/exp/p_bar/...)
    rows_by_block = max(1, target_block_bytes // in_row)
    # 2x input (double-buffered) + working set + ~4 MiB headroom for the output
    # slab / compiler scratch must fit under the VMEM limit.
    rows_by_vmem = max(1, (vmem_limit_bytes - (4 << 20)) // (2 * in_row + work_row))
    max_rows = min(rows_by_block, rows_by_vmem)

    tile = max(sublane_mult, (max_rows // sublane_mult) * sublane_mult)
    # Keep >= 2 grid steps when possible so v7x can shard the "parallel" batch
    # axis across both TensorCores (cost on single-TC chips: ~0.35 us).
    tile = min(tile, _round_up(-(-B // 2), sublane_mult))
    if tile >= B:
        return B                                  # full extent is always legal
    return tile


def _make_kernel(total_rows, batch_tile, exp_dtype, needs_mask):
    exp_in_f32 = jnp.dtype(exp_dtype) == jnp.dtype(jnp.float32)

    def kernel(pred_ref, out_ref):
        num_particles = pred_ref.shape[0]

        def particle_probs(m):
            logits = pred_ref[m].astype(jnp.float32)               # (tb, C)
            mx = jnp.max(logits, axis=-1, keepdims=True)           # XLU
            z = logits - mx
            if not exp_in_f32:
                z = z.astype(exp_dtype)                            # bf16 EUP path
            e = jnp.exp(z).astype(jnp.float32)                     # EUP
            s = jnp.sum(e, axis=-1, keepdims=True)                 # XLU
            r = pl.reciprocal(s, approx=True)                      # EUP (free slot)
            r = r * (2.0 - s * r)                                  # 1 Newton step -> f32 accuracy
            return e * r                                           # VPU

        def body(m, p_bar):
            return p_bar + particle_probs(m)

        # fori_loop bounds per-particle f32 temporaries' live ranges; unroll
        # small particle counts for LLO scheduler visibility.
        p_bar = lax.fori_loop(1, num_particles, body, particle_probs(0),
                              unroll=(num_particles <= 8))
        p_bar = p_bar * jnp.float32(1.0 / num_particles)           # (tb, C)

        # Entropy per batch row, then partial sum over this tile's valid rows.
        ent = -jnp.sum(p_bar * jnp.log(p_bar + _EPS),
                       axis=-1, keepdims=True)                     # (tb, 1)
        if needs_mask:
            row0 = pl.program_id(0) * batch_tile
            rows = row0 + lax.broadcasted_iota(jnp.int32, ent.shape, 0)
            ent = jnp.where(rows < total_rows, ent, 0.0)           # drop padded tail rows
        tile_sum = jnp.sum(ent)

        # Lane-dense, fully (8,128)-aligned store of the per-tile partial sum.
        out_ref[...] = jnp.full(out_ref.shape, tile_sum, dtype=jnp.float32)

    return kernel


def mean_softmax_entropy(model_bs, x, pred, gt, *, batch_tile=None,
                         target_block_bytes=None, vmem_limit_bytes=None,
                         exp_dtype=None):
    """Pallas implementation of MeanSoftmaxEntropy.forward.

    Only `pred` (shape (M, B, C)) participates in the loss, matching the
    PyTorch module (model_bs, x, gt are unused there).
    """
    del model_bs, x, gt   # unused by the loss, kept for signature fidelity
    M, B, C = pred.shape
    itemsize = pred.dtype.itemsize
    sublane_mult = max(8, 32 // itemsize)

    default_block, default_vmem = _default_budgets()
    if target_block_bytes is None:
        target_block_bytes = default_block
    if vmem_limit_bytes is None:
        vmem_limit_bytes = default_vmem
    if exp_dtype is None:
        # bf16 exp on bf16 inputs (v6e/v7x EUP win); f32 otherwise.
        # TODO(synk): force f32 exp on v5e (no bf16 EUP) if it profiles slower.
        exp_dtype = jnp.bfloat16 if pred.dtype == jnp.bfloat16 else jnp.float32

    if batch_tile is None:
        batch_tile = _pick_batch_tile(M, B, C, itemsize,
                                      target_block_bytes, vmem_limit_bytes)
    else:
        batch_tile = min(int(batch_tile), B)
        if batch_tile < B:
            batch_tile = _round_up(batch_tile, sublane_mult)
            if batch_tile >= B:
                batch_tile = B

    num_tiles = pl.cdiv(B, batch_tile)
    needs_mask = (num_tiles * batch_tile != B)

    kernel = _make_kernel(B, batch_tile, exp_dtype, needs_mask)

    partial_sums = pl.pallas_call(
        kernel,
        out_shape=jax.ShapeDtypeStruct((num_tiles, _OUT_SUBLANES, _LANES),
                                       jnp.float32),
        grid_spec=pltpu.PrefetchScalarGridSpec(
            num_scalar_prefetch=0,
            grid=(num_tiles,),
            in_specs=[
                # Full particle and class extents, tiled (possibly ragged) batch.
                pl.BlockSpec((M, batch_tile, C), lambda i: (0, i, 0)),
            ],
            out_specs=pl.BlockSpec((1, _OUT_SUBLANES, _LANES),
                                   lambda i: (i, 0, 0)),
        ),
        compiler_params=pltpu.CompilerParams(
            dimension_semantics=("parallel",),   # no cross-tile state
            vmem_limit_bytes=vmem_limit_bytes,
        ),
    )(pred)

    # Final reduction in the surrounding JAX graph: loss = -mean_B(entropy).
    return -jnp.sum(partial_sums[:, 0, 0]) / jnp.float32(B)


def _reference(pred):
    p = jax.nn.softmax(pred.astype(jnp.float32), axis=-1).mean(0)
    ent = -jnp.sum(p * jnp.log(p + _EPS), axis=-1)
    return -ent.mean()


if __name__ == "__main__":
    key = jax.random.PRNGKey(0)
    k1, k2, k3, k4, k5 = jax.random.split(key, 5)

    # Case 1: lane-dense classes (C multiple of 128), auto-sized batch tile
    # (capped to give >= 2 grid steps so both v7x TensorCores get work).
    M, B, C = 4, 64, 128
    pred = jax.random.normal(k1, (M, B, C), dtype=jnp.float32)
    x = jax.random.normal(k2, (B, 3, 8, 8), dtype=jnp.float32)   # unused input
    gt = jax.random.randint(k3, (B,), 0, C)                       # unused labels

    loss = jax.block_until_ready(mean_softmax_entropy(M, x, pred, gt))
    ref = _reference(pred)
    assert jnp.allclose(loss, ref, atol=1e-5, rtol=1e-5), (loss, ref)

    # Case 2: non-dividing batch + narrow class axis: exercises the cdiv grid
    # and the in-kernel tail-row masking (grid = cdiv(22, 8) = 3, 2 padded
    # rows in the last tile are masked out of the partial sum).
    M2, B2, C2 = 3, 22, 32
    pred2 = jax.random.normal(k4, (M2, B2, C2), dtype=jnp.float32)
    loss2 = jax.block_until_ready(
        mean_softmax_entropy(M2, None, pred2, None, batch_tile=8))
    ref2 = _reference(pred2)
    assert jnp.allclose(loss2, ref2, atol=1e-5, rtol=1e-5), (loss2, ref2)

    # Case 3: bf16 logits — bf16 stays on the HBM DMA and the exp runs in
    # bf16 (EUP relief on v6e/v7x); looser tolerance for the bf16 exp path.
    M3, B3, C3 = 2, 40, 128
    pred3 = jax.random.normal(k5, (M3, B3, C3),
                              dtype=jnp.float32).astype(jnp.bfloat16)
    loss3 = jax.block_until_ready(mean_softmax_entropy(M3, None, pred3, None))
    ref3 = _reference(pred3)
    assert jnp.allclose(loss3, ref3, atol=3e-2, rtol=3e-2), (loss3, ref3)

    print("KERNEL_OK")
</pallas_src>

<mosaic_0001>
module attributes {stable_mosaic.version = 11 : i64} {
  func.func @kernel(%arg0: i32, %arg1: memref<4x32x128xf32, #tpu.memory_space<vmem>>, %arg2: memref<1x8x128xf32, #tpu.memory_space<vmem>>) attributes {dimension_semantics = [#tpu.dimension_semantics<parallel>], iteration_bounds = array<i64: 2>, scalar_prefetch = 0 : i64, scratch_operands = 0 : i64, tpu.core_type = #tpu.core_type<tc>, window_params = [{transform_indices = @transform_0, window_bounds = array<i64: 4, 32, 128>}, {transform_indices = @transform_1, window_bounds = array<i64: 1, 8, 128>}]} {
    %c0 = arith.constant 0 : index
    %c0_0 = arith.constant 0 : index
    %c0_1 = arith.constant 0 : index
    %0 = vector.load %arg1[%c0, %c0_0, %c0_1] : memref<4x32x128xf32, #tpu.memory_space<vmem>>, vector<1x32x128xf32>
    %1 = vector.shape_cast %0 : vector<1x32x128xf32> to vector<32x128xf32>
    %cst = arith.constant dense<0xFF800000> : vector<32xf32>
    %2 = vector.multi_reduction <maximumf>, %1, %cst [1] : vector<32x128xf32> to vector<32xf32>
    %3 = vector.shape_cast %2 : vector<32xf32> to vector<32x1xf32>
    %4 = vector.broadcast %3 : vector<32x1xf32> to vector<32x128xf32>
    %5 = arith.subf %1, %4 : vector<32x128xf32>
    %6 = math.exp %5 : vector<32x128xf32>
    %cst_2 = arith.constant dense<0.000000e+00> : vector<32xf32>
    %7 = vector.multi_reduction <add>, %6, %cst_2 [1] : vector<32x128xf32> to vector<32xf32>
    %8 = vector.shape_cast %7 : vector<32xf32> to vector<32x1xf32>
    %9 = tpu.reciprocal %8 {approx = true} : vector<32x1xf32> -> vector<32x1xf32>
    %10 = arith.mulf %8, %9 : vector<32x1xf32>
    %cst_3 = arith.constant 2.000000e+00 : f32
    %11 = vector.broadcast %cst_3 : f32 to vector<32x1xf32>
    %12 = arith.subf %11, %10 : vector<32x1xf32>
    %13 = arith.mulf %9, %12 : vector<32x1xf32>
    %14 = vector.broadcast %13 : vector<32x1xf32> to vector<32x128xf32>
    %15 = arith.mulf %6, %14 : vector<32x128xf32>
    %c1_i32 = arith.constant 1 : i32
    %16 = arith.index_cast %c1_i32 : i32 to index
    %c0_4 = arith.constant 0 : index
    %c0_5 = arith.constant 0 : index
    %17 = vector.load %arg1[%16, %c0_4, %c0_5] : memref<4x32x128xf32, #tpu.memory_space<vmem>>, vector<1x32x128xf32>
    %18 = vector.shape_cast %17 : vector<1x32x128xf32> to vector<32x128xf32>
    %cst_6 = arith.constant dense<0xFF800000> : vector<32xf32>
    %19 = vector.multi_reduction <maximumf>, %18, %cst_6 [1] : vector<32x128xf32> to vector<32xf32>
    %20 = vector.shape_cast %19 : vector<32xf32> to vector<32x1xf32>
    %21 = vector.broadcast %20 : vector<32x1xf32> to vector<32x128xf32>
    %22 = arith.subf %18, %21 : vector<32x128xf32>
    %23 = math.exp %22 : vector<32x128xf32>
    %cst_7 = arith.constant dense<0.000000e+00> : vector<32xf32>
    %24 = vector.multi_reduction <add>, %23, %cst_7 [1] : vector<32x128xf32> to vector<32xf32>
    %25 = vector.shape_cast %24 : vector<32xf32> to vector<32x1xf32>
    %26 = tpu.reciprocal %25 {approx = true} : vector<32x1xf32> -> vector<32x1xf32>
    %27 = arith.mulf %25, %26 : vector<32x1xf32>
    %cst_8 = arith.constant 2.000000e+00 : f32
    %28 = vector.broadcast %cst_8 : f32 to vector<32x1xf32>
    %29 = arith.subf %28, %27 : vector<32x1xf32>
    %30 = arith.mulf %26, %29 : vector<32x1xf32>
    %31 = vector.broadcast %30 : vector<32x1xf32> to vector<32x128xf32>
    %32 = arith.mulf %23, %31 : vector<32x128xf32>
    %33 = arith.addf %15, %32 : vector<32x128xf32>
    %c2_i32 = arith.constant 2 : i32
    %34 = arith.index_cast %c2_i32 : i32 to index
    %c0_9 = arith.constant 0 : index
    %c0_10 = arith.constant 0 : index
    %35 = vector.load %arg1[%34, %c0_9, %c0_10] : memref<4x32x128xf32, #tpu.memory_space<vmem>>, vector<1x32x128xf32>
    %36 = vector.shape_cast %35 : vector<1x32x128xf32> to vector<32x128xf32>
    %cst_11 = arith.constant dense<0xFF800000> : vector<32xf32>
    %37 = vector.multi_reduction <maximumf>, %36, %cst_11 [1] : vector<32x128xf32> to vector<32xf32>
    %38 = vector.shape_cast %37 : vector<32xf32> to vector<32x1xf32>
    %39 = vector.broadcast %38 : vector<32x1xf32> to vector<32x128xf32>
    %40 = arith.subf %36, %39 : vector<32x128xf32>
    %41 = math.exp %40 : vector<32x128xf32>
    %cst_12 = arith.constant dense<0.000000e+00> : vector<32xf32>
    %42 = vector.multi_reduction <add>, %41, %cst_12 [1] : vector<32x128xf32> to vector<32xf32>
    %43 = vector.shape_cast %42 : vector<32xf32> to vector<32x1xf32>
    %44 = tpu.reciprocal %43 {approx = true} : vector<32x1xf32> -> vector<32x1xf32>
    %45 = arith.mulf %43, %44 : vector<32x1xf32>
    %cst_13 = arith.constant 2.000000e+00 : f32
    %46 = vector.broadcast %cst_13 : f32 to vector<32x1xf32>
    %47 = arith.subf %46, %45 : vector<32x1xf32>
    %48 = arith.mulf %44, %47 : vector<32x1xf32>
    %49 = vector.broadcast %48 : vector<32x1xf32> to vector<32x128xf32>
    %50 = arith.mulf %41, %49 : vector<32x128xf32>
    %51 = arith.addf %33, %50 : vector<32x128xf32>
    %c3_i32 = arith.constant 3 : i32
    %52 = arith.index_cast %c3_i32 : i32 to index
    %c0_14 = arith.constant 0 : index
    %c0_15 = arith.constant 0 : index
    %53 = vector.load %arg1[%52, %c0_14, %c0_15] : memref<4x32x128xf32, #tpu.memory_space<vmem>>, vector<1x32x128xf32>
    %54 = vector.shape_cast %53 : vector<1x32x128xf32> to vector<32x128xf32>
    %cst_16 = arith.constant dense<0xFF800000> : vector<32xf32>
    %55 = vector.multi_reduction <maximumf>, %54, %cst_16 [1] : vector<32x128xf32> to vector<32xf32>
    %56 = vector.shape_cast %55 : vector<32xf32> to vector<32x1xf32>
    %57 = vector.broadcast %56 : vector<32x1xf32> to vector<32x128xf32>
    %58 = arith.subf %54, %57 : vector<32x128xf32>
    %59 = math.exp %58 : vector<32x128xf32>
    %cst_17 = arith.constant dense<0.000000e+00> : vector<32xf32>
    %60 = vector.multi_reduction <add>, %59, %cst_17 [1] : vector<32x128xf32> to vector<32xf32>
    %61 = vector.shape_cast %60 : vector<32xf32> to vector<32x1xf32>
    %62 = tpu.reciprocal %61 {approx = true} : vector<32x1xf32> -> vector<32x1xf32>
    %63 = arith.mulf %61, %62 : vector<32x1xf32>
    %cst_18 = arith.constant 2.000000e+00 : f32
    %64 = vector.broadcast %cst_18 : f32 to vector<32x1xf32>
    %65 = arith.subf %64, %63 : vector<32x1xf32>
    %66 = arith.mulf %62, %65 : vector<32x1xf32>
    %67 = vector.broadcast %66 : vector<32x1xf32> to vector<32x128xf32>
    %68 = arith.mulf %59, %67 : vector<32x128xf32>
    %69 = arith.addf %51, %68 : vector<32x128xf32>
    %c3_i32_19 = arith.constant 3 : i32
    %cst_20 = arith.constant 2.500000e-01 : f32
    %70 = vector.broadcast %cst_20 : f32 to vector<32x128xf32>
    %71 = arith.mulf %69, %70 : vector<32x128xf32>
    %cst_21 = arith.constant 9.99999996E-13 : f32
    %72 = vector.broadcast %cst_21 : f32 to vector<32x128xf32>
    %73 = arith.addf %71, %72 : vector<32x128xf32>
    %74 = math.log %73 : vector<32x128xf32>
    %75 = arith.mulf %71, %74 : vector<32x128xf32>
    %cst_22 = arith.constant dense<0.000000e+00> : vector<32xf32>
    %76 = vector.multi_reduction <add>, %75, %cst_22 [1] : vector<32x128xf32> to vector<32xf32>
    %77 = vector.shape_cast %76 : vector<32xf32> to vector<32x1xf32>
    %cst_23 = arith.constant 0.000000e+00 : f32
    %78 = vector.broadcast %cst_23 : f32 to vector<32x1xf32>
    %79 = arith.subf %78, %77 : vector<32x1xf32>
    %80 = vector.shape_cast %79 : vector<32x1xf32> to vector<1x32x1xf32>
    %cst_24 = arith.constant dense<0.000000e+00> : vector<1xf32>
    %81 = vector.multi_reduction <add>, %80, %cst_24 [1, 2] : vector<1x32x1xf32> to vector<1xf32>
    %82 = vector.shape_cast %81 : vector<1xf32> to vector<1x1x1xf32>
    %83 = vector.extract %82[0, 0, 0] : f32 from vector<1x1x1xf32>
    %84 = vector.broadcast %83 : f32 to vector<1x8x128xf32>
    %c0_25 = arith.constant 0 : index
    %c0_26 = arith.constant 0 : index
    %c0_27 = arith.constant 0 : index
    %85 = vector.load %arg2[%c0_25, %c0_26, %c0_27] : memref<1x8x128xf32, #tpu.memory_space<vmem>>, vector<1x8x128xf32>
    tpu.vector_store %arg2[%c0_25, %c0_26, %c0_27], %84 {strides = array<i32>} : memref<1x8x128xf32, #tpu.memory_space<vmem>>, vector<1x8x128xf32>,
    return
  }
  func.func @transform_0(%arg0: i32) -> (i32, i32, i32) {
    %c0_i32 = arith.constant 0 : i32
    %c0_i32_0 = arith.constant 0 : i32
    %c0_i32_1 = arith.constant 0 : i32
    return %c0_i32, %arg0, %c0_i32_0 : i32, i32, i32
  }
  func.func @transform_1(%arg0: i32) -> (i32, i32, i32) {
    %c0_i32 = arith.constant 0 : i32
    %c0_i32_0 = arith.constant 0 : i32
    %c0_i32_1 = arith.constant 0 : i32
    return %arg0, %c0_i32, %c0_i32_0 : i32, i32, i32
  }
}

</mosaic_0001>

<llo_original>
// kernel: tpu_custom_call.1
$region0: #{tpu_custom_call.1}
  #allocation0 [shape = 'u32[]', space=smem, size = 0x4, offset = 0x4, fixed_abs, tag = 'smem constant byte address 0x4 - core index']
  #allocation1 [shape = 'u32[144,128]{1,0:T(1,128)}', space=vmem, size = 0x12000, scoped, tag = 'internal scratch']
  #allocation6 [shape = 's32[]', space=sflag, size = 0x4, offset = 0, fixed_abs, tag = 'sflag constant byte address 0x0 - dummy sync flag']
  %s0 = inlined_call_operand.hbm [shape: f32[4,64,128], index: 0, kind: input, shape index: {}]
  %s1 = inlined_call_operand.hbm [shape: f32[2,8,128], index: 1, kind: output, shape index: {}]
  %s2 = sld [smem:[#allocation0]]
  $region41: #{tpu_custom_call.1} parent=0
    _
  %s4 = ssub.s32 1, %s2
  %s5 = scalar_select 0, %s4, %s2
  $region1: #{tpu_custom_call.1} parent=0
    #allocation2 [shape = 'u8[131072]{0}', space=vmem, size = 0x20000, scoped, tag = 'input window, operand 0']
    #allocation3 [shape = 's32[2]{0}', space=sflag, size = 0x8, scoped, tag = 'scoped memory for tpu_custom_call.1']
    #allocation4 [shape = 's32[2]{0}', space=sflag, size = 0x8, scoped, tag = 'scoped memory for tpu_custom_call.1']
    #allocation5 [shape = 'u8[8192]{0}', space=vmem, size = 0x2000, scoped, tag = 'output window, operand 0']
    %6 = vsyncpa [#allocation3], 0
    %s7 = scalar_lea.sflag [#allocation3], 1
    %8 = vsyncpa %s7, 0
    %9 = vsyncpa [#allocation4], 0
    %s10 = scalar_lea.sflag [#allocation4], 1
    %11 = vsyncpa %s10, 0
    loop: start=0, step=1, limit=4
    $region2: #{tpu_custom_call.1} parent=1 // loop_pre_header
      _
    $region3: #{tpu_custom_call.1} parent=1 // loop_header
      %s13 = sphi 0, %s17
      %p14 = scmp.ge.s32.totalorder %s13, 4
      %s23 = sphi 0, %s25
      %s26 = sphi 0, %s23
      %s27 = sphi 0, %s26
      %s43 = sphi 0, %s27
      %s49 = sphi 0, %s51
      %s52 = sphi 0, %s49
      %s53 = sphi 0, %s52
      %s69 = sphi 0, %s53
    $region4: #{tpu_custom_call.1} parent=1 // loop_header_branch
      %16 = sbr.rel (%p14) target = $region8
    $region5: #{tpu_custom_call.1} parent=1 // loop_body
      %s18 = ssub.s32 %s13, 1
      %s19 = ssub.s32 %s13, 2
      %s20 = sadd.s32 %s13, 1
      %s21 = ssub.s32 %s13, %s20
      %p22 = scmp.eq.s32.totalorder %s21, 0
      %s24 = sadd.s32 %s23, 1
      %s25 = scalar_select %p22, %s23, %s24
      %p28 = pneg %p22
      %p29 = scmp.eq.s32.totalorder %s13, 1
      %p30 = por %p28, %p29
      %p31 = scmp.ne.s32.totalorder %s23, %s26
      %p32 = scmp.eq.s32.totalorder %s13, 0
      %p33 = por %p31, %p32
      %p34 = scmp.ne.s32.totalorder %s23, %s26
      %p35 = scmp.eq.s32.totalorder %s18, 1
      %p36 = por %p34, %p35
      %p37 = scmp.ne.s32.totalorder %s26, %s27
      %p38 = scmp.eq.s32.totalorder %s18, 0
      %p39 = por %p37, %p38
      %p40 = scmp.ne.s32.totalorder %s26, %s27
      %p41 = scmp.eq.s32.totalorder %s19, 1
      %p42 = por %p40, %p41
      %p44 = scmp.ne.s32.totalorder %s27, %s43
      %p45 = scmp.eq.s32.totalorder %s19, 0
      %p46 = por %p44, %p45
      %s47 = ssub.s32 %s13, %s20
      %p48 = scmp.eq.s32.totalorder %s47, 0
      %s50 = sadd.s32 %s49, 1
      %s51 = scalar_select %p48, %s49, %s50
      %p54 = pneg %p48
      %p55 = scmp.eq.s32.totalorder %s13, 1
      %p56 = por %p54, %p55
      %p57 = scmp.ne.s32.totalorder %s49, %s52
      %p58 = scmp.eq.s32.totalorder %s13, 0
      %p59 = por %p57, %p58
      %p60 = scmp.ne.s32.totalorder %s49, %s52
      %p61 = scmp.eq.s32.totalorder %s18, 1
      %p62 = por %p60, %p61
      %p63 = scmp.ne.s32.totalorder %s52, %s53
      %p64 = scmp.eq.s32.totalorder %s18, 0
      %p65 = por %p63, %p64
      %p66 = scmp.ne.s32.totalorder %s52, %s53
      %p67 = scmp.eq.s32.totalorder %s19, 1
      %p68 = por %p66, %p67
      %p70 = scmp.ne.s32.totalorder %s53, %s69
      %p71 = scmp.eq.s32.totalorder %s19, 0
      %p72 = por %p70, %p71
      %p73 = scmp.le.s32.totalorder 1, %s13
      %p74 = scmp.lt.s32.totalorder %s13, 3
      %p75 = pnand %p73, %p74
      %p76 = pneg %p75
      // Predicated region
      $region9: #{tpu_custom_call.1} parent=5 // pred_check
        _
      $region10: #{tpu_custom_call.1} parent=5 // pred_check_branch
        %78 = sbr.rel (%p75) target = $region12
      $region11: #{tpu_custom_call.1} parent=5 // pred_region
        %s79 = ssub.s32 %s13, 1
      $region12: #{tpu_custom_call.1} parent=5 // pred_fallthru
        _
      %p80 = scmp.lt.s32.totalorder %s13, 2
      // Predicated region
      $region13: #{tpu_custom_call.1} parent=5 // pred_check
        %p81 = pneg %p80
      $region14: #{tpu_custom_call.1} parent=5 // pred_check_branch
        %83 = sbr.rel (%p81) target = $region16
      $region15: #{tpu_custom_call.1} parent=5 // pred_region
        // Predicated region
        $region17: #{tpu_custom_call.1} parent=15 // pred_check
          %p84 = pneg %p33
        $region18: #{tpu_custom_call.1} parent=15 // pred_check_branch
          %86 = sbr.rel (%p84) target = $region20
        $region19: #{tpu_custom_call.1} parent=15 // pred_region
          #allocation7 [shape = 'u32[6]{0}', space=smem, size = 0x18, scoped, tag = 'DMA stride descriptor']
          %s87 = sand.u32 %s23, 1
          %s88 = scalar_lea.sflag [#allocation3], %s87
          %s89 = sand.u32 %s23, 1
          %s90 = smul.addr %s89, 128
          %s91 = scalar_lea.vmem [#allocation2], %s90
          %s92 = smul.u32 4, %s13
          %s94 = ssub.s32 2048, 2048
          %95 = vsyncadd %s88, %s94
          %s96 = smul.addr %s92, 128
          %s97 = scalar_lea.hbm %s0, %s96
          %s99 = sshll.u32 1, 14
          %s100 = sxor.u32 4294967295, %s99
          %s102 = sld [smem:[#allocation0]]
          %s103 = sadd.s32 2, %s102
          %s105 = sshll.u32 7, 26
          %s106 = sxor.u32 4294967295, %s105
          %s107 = sand.u32 0, %s106
          %s108 = sshll.u32 %s103, 26
          %s109 = sor.u32 %s107, %s108
          %s110 = sshll.u32 %s91, 4
          %s111 = int_to_ptr.vmem [resolvable:$true] %s110
          %117 = sst [smem:[#allocation7]] 1024
          %s118 = scalar_lea.smem [#allocation7], 1
          %119 = sst [smem:[%s118]] 512
          %s120 = scalar_lea.smem [#allocation7], 2
          %121 = sst [smem:[%s120]] 4
          %s122 = scalar_lea.smem [#allocation7], 3
          %123 = sst [smem:[%s122]] 128
          %s124 = scalar_lea.smem [#allocation7], 4
          %125 = sst [smem:[%s124]] 128
          %s126 = scalar_lea.smem [#allocation7], 5
          %127 = sst [smem:[%s126]] 8
          %129 = dma.general %s97, 2048, %s111, %s88, 131072, [#allocation7], %s109, 0
        $region20: #{tpu_custom_call.1} parent=15 // pred_fallthru
          _
      $region16: #{tpu_custom_call.1} parent=5 // pred_fallthru
        _
      %p130 = scmp.le.s32.totalorder 1, %s13
      %p131 = scmp.lt.s32.totalorder %s13, 3
      %p132 = pnand %p130, %p131
      %p133 = pneg %p132
      // Predicated region
      $region21: #{tpu_custom_call.1} parent=5 // pred_check
        _
      $region22: #{tpu_custom_call.1} parent=5 // pred_check_branch
        %135 = sbr.rel (%p132) target = $region24
      $region23: #{tpu_custom_call.1} parent=5 // pred_region
        %s136 = ssub.s32 %s13, 1
        %s137 = sand.u32 %s26, 1
        %s138 = scalar_lea.sflag [#allocation3], %s137
        %s139 = sand.u32 %s26, 1
        %s140 = smul.addr %s139, 128
        %s141 = scalar_lea.vmem [#allocation2], %s140
        // Predicated region
        $region25: #{tpu_custom_call.1} parent=23 // pred_check
          %p142 = pneg %p39
        $region26: #{tpu_custom_call.1} parent=23 // pred_check_branch
          %144 = sbr.rel (%p142) target = $region28
        $region27: #{tpu_custom_call.1} parent=23 // pred_region
          %145 = dma.done %s138, 2048
        $region28: #{tpu_custom_call.1} parent=23 // pred_fallthru
          _
        %s146 = sand.u32 %s26, 1
        %s147 = scalar_lea.sflag [#allocation3], %s146
        %s148 = sand.u32 %s26, 1
        %s149 = smul.addr %s148, 128
        %s150 = scalar_lea.vmem [#allocation2], %s149
        %p151 = pneg %p39
        %p152 = pneg %p36
        %p153 = pneg %p65
        %p154 = pneg %p62
        %s155 = sand.u32 %s52, 1
        %s156 = scalar_lea.sflag [#allocation4], %s155
        %s157 = sand.u32 %s52, 1
        %s158 = smul.addr %s157, 8
        %s159 = scalar_lea.vmem [#allocation5], %s158
        %s160 = smul.u32 4, %s18
        %v161 = vld [vmem:[%s141] sm:$0xff]
        %v162 = vld [vmem:[%s141 + $0x8] sm:$0xff]
        %v163 = vld [vmem:[%s141 + $0x10] sm:$0xff]
        %v164 = vld [vmem:[%s141 + $0x18] sm:$0xff]
        %165 = vmax.xlane.f32.xlu0 %v161
        %v166 = vpop.xlane.xlu0 %165
        %167 = vmax.xlane.f32.xlu0 %v162
        %v168 = vpop.xlane.xlu0 %167
        %169 = vmax.xlane.f32.xlu0 %v163
        %v170 = vpop.xlane.xlu0 %169
        %171 = vmax.xlane.f32.xlu0 %v164
        %v172 = vpop.xlane.xlu0 %171
        %v173 = vsub.f32 %v161, %v166
        %v174 = vsub.f32 %v162, %v168
        %v175 = vsub.f32 %v163, %v170
        %v176 = vsub.f32 %v164, %v172
        %v177 = vmul.f32 %v173, 1.442695
        %v178 = vpow.pop %v177
        %v179 = vmul.f32 %v174, 1.442695
        %v180 = vpow.pop %v179
        %v181 = vmul.f32 %v175, 1.442695
        %v182 = vpow.pop %v181
        %v183 = vmul.f32 %v176, 1.442695
        %v184 = vpow.pop %v183
        %185 = vadd.xlane.f32.xlu0 %v178
        %v186 = vpop.xlane.xlu0 %185
        %187 = vadd.xlane.f32.xlu0 %v180
        %v188 = vpop.xlane.xlu0 %187
        %189 = vadd.xlane.f32.xlu0 %v182
        %v190 = vpop.xlane.xlu0 %189
        %191 = vadd.xlane.f32.xlu0 %v184
        %v192 = vpop.xlane.xlu0 %191
        %v193 = vrcp.pop %v186
        %v194 = vrcp.pop %v188
        %v195 = vrcp.pop %v190
        %v196 = vrcp.pop %v192
        %v197 = vmul.f32 %v186, %v193
        %v198 = vmul.f32 %v188, %v194
        %v199 = vmul.f32 %v190, %v195
        %v200 = vmul.f32 %v192, %v196
        %v201 = vsub.f32 2.0, %v197
        %v202 = vsub.f32 2.0, %v198
        %v203 = vsub.f32 2.0, %v199
        %v204 = vsub.f32 2.0, %v200
        %v205 = vmul.f32 %v193, %v201
        %v206 = vmul.f32 %v194, %v202
        %v207 = vmul.f32 %v195, %v203
        %v208 = vmul.f32 %v196, %v204
        %v209 = vmul.f32 %v178, %v205
        %v210 = vmul.f32 %v180, %v206
        %v211 = vmul.f32 %v182, %v207
        %v212 = vmul.f32 %v184, %v208
        %s213 = scalar_lea.vmem %s141, 32 [#allocation2]
        %v214 = vld [vmem:[%s213] sm:$0xff]
        %v215 = vld [vmem:[%s213 + $0x8] sm:$0xff]
        %v216 = vld [vmem:[%s213 + $0x10] sm:$0xff]
        %v217 = vld [vmem:[%s213 + $0x18] sm:$0xff]
        %218 = vmax.xlane.f32.xlu0 %v214
        %v219 = vpop.xlane.xlu0 %218
        %220 = vmax.xlane.f32.xlu0 %v215
        %v221 = vpop.xlane.xlu0 %220
        %222 = vmax.xlane.f32.xlu0 %v216
        %v223 = vpop.xlane.xlu0 %222
        %224 = vmax.xlane.f32.xlu0 %v217
        %v225 = vpop.xlane.xlu0 %224
        %v226 = vsub.f32 %v214, %v219
        %v227 = vsub.f32 %v215, %v221
        %v228 = vsub.f32 %v216, %v223
        %v229 = vsub.f32 %v217, %v225
        %v230 = vmul.f32 %v226, 1.442695
        %v231 = vpow.pop %v230
        %v232 = vmul.f32 %v227, 1.442695
        %v233 = vpow.pop %v232
        %v234 = vmul.f32 %v228, 1.442695
        %v235 = vpow.pop %v234
        %v236 = vmul.f32 %v229, 1.442695
        %v237 = vpow.pop %v236
        %238 = vadd.xlane.f32.xlu0 %v231
        %v239 = vpop.xlane.xlu0 %238
        %240 = vadd.xlane.f32.xlu0 %v233
        %v241 = vpop.xlane.xlu0 %240
        %242 = vadd.xlane.f32.xlu0 %v235
        %v243 = vpop.xlane.xlu0 %242
        %244 = vadd.xlane.f32.xlu0 %v237
        %v245 = vpop.xlane.xlu0 %244
        %v246 = vrcp.pop %v239
        %v247 = vrcp.pop %v241
        %v248 = vrcp.pop %v243
        %v249 = vrcp.pop %v245
        %v250 = vmul.f32 %v239, %v246
        %v251 = vmul.f32 %v241, %v247
        %v252 = vmul.f32 %v243, %v248
        %v253 = vmul.f32 %v245, %v249
        %v254 = vsub.f32 2.0, %v250
        %v255 = vsub.f32 2.0, %v251
        %v256 = vsub.f32 2.0, %v252
        %v257 = vsub.f32 2.0, %v253
        %v258 = vmul.f32 %v246, %v254
        %v259 = vmul.f32 %v247, %v255
        %v260 = vmul.f32 %v248, %v256
        %v261 = vmul.f32 %v249, %v257
        %v262 = vmul.f32 %v231, %v258
        %v263 = vmul.f32 %v233, %v259
        %v264 = vmul.f32 %v235, %v260
        %v265 = vmul.f32 %v237, %v261
        %v266 = vadd.f32 %v209, %v262
        %v267 = vadd.f32 %v210, %v263
        %v268 = vadd.f32 %v211, %v264
        %v269 = vadd.f32 %v212, %v265
        %s270 = scalar_lea.vmem %s141, 64 [#allocation2]
        %v271 = vld [vmem:[%s270] sm:$0xff]
        %v272 = vld [vmem:[%s270 + $0x8] sm:$0xff]
        %v273 = vld [vmem:[%s270 + $0x10] sm:$0xff]
        %v274 = vld [vmem:[%s270 + $0x18] sm:$0xff]
        %275 = vmax.xlane.f32.xlu0 %v271
        %v276 = vpop.xlane.xlu0 %275
        %277 = vmax.xlane.f32.xlu0 %v272
        %v278 = vpop.xlane.xlu0 %277
        %279 = vmax.xlane.f32.xlu0 %v273
        %v280 = vpop.xlane.xlu0 %279
        %281 = vmax.xlane.f32.xlu0 %v274
        %v282 = vpop.xlane.xlu0 %281
        %v283 = vsub.f32 %v271, %v276
        %v284 = vsub.f32 %v272, %v278
        %v285 = vsub.f32 %v273, %v280
        %v286 = vsub.f32 %v274, %v282
        %v287 = vmul.f32 %v283, 1.442695
        %v288 = vpow.pop %v287
        %v289 = vmul.f32 %v284, 1.442695
        %v290 = vpow.pop %v289
        %v291 = vmul.f32 %v285, 1.442695
        %v292 = vpow.pop %v291
        %v293 = vmul.f32 %v286, 1.442695
        %v294 = vpow.pop %v293
        %295 = vadd.xlane.f32.xlu0 %v288
        %v296 = vpop.xlane.xlu0 %295
        %297 = vadd.xlane.f32.xlu0 %v290
        %v298 = vpop.xlane.xlu0 %297
        %299 = vadd.xlane.f32.xlu0 %v292
        %v300 = vpop.xlane.xlu0 %299
        %301 = vadd.xlane.f32.xlu0 %v294
        %v302 = vpop.xlane.xlu0 %301
        %v303 = vrcp.pop %v296
        %v304 = vrcp.pop %v298
        %v305 = vrcp.pop %v300
        %v306 = vrcp.pop %v302
        %v307 = vmul.f32 %v296, %v303
        %v308 = vmul.f32 %v298, %v304
        %v309 = vmul.f32 %v300, %v305
        %v310 = vmul.f32 %v302, %v306
        %v311 = vsub.f32 2.0, %v307
        %v312 = vsub.f32 2.0, %v308
        %v313 = vsub.f32 2.0, %v309
        %v314 = vsub.f32 2.0, %v310
        %v315 = vmul.f32 %v303, %v311
        %v316 = vmul.f32 %v304, %v312
        %v317 = vmul.f32 %v305, %v313
        %v318 = vmul.f32 %v306, %v314
        %v319 = vmul.f32 %v288, %v315
        %v320 = vmul.f32 %v290, %v316
        %v321 = vmul.f32 %v292, %v317
        %v322 = vmul.f32 %v294, %v318
        %v323 = vadd.f32 %v266, %v319
        %v324 = vadd.f32 %v267, %v320
        %v325 = vadd.f32 %v268, %v321
        %v326 = vadd.f32 %v269, %v322
        %s327 = scalar_lea.vmem %s141, 96 [#allocation2]
        %v328 = vld [vmem:[%s327] sm:$0xff]
        %v329 = vld [vmem:[%s327 + $0x8] sm:$0xff]
        %v330 = vld [vmem:[%s327 + $0x10] sm:$0xff]
        %v331 = vld [vmem:[%s327 + $0x18] sm:$0xff]
        %332 = vmax.xlane.f32.xlu0 %v328
        %v333 = vpop.xlane.xlu0 %332
        %334 = vmax.xlane.f32.xlu0 %v329
        %v335 = vpop.xlane.xlu0 %334
        %336 = vmax.xlane.f32.xlu0 %v330
        %v337 = vpop.xlane.xlu0 %336
        %338 = vmax.xlane.f32.xlu0 %v331
        %v339 = vpop.xlane.xlu0 %338
        %v340 = vsub.f32 %v328, %v333
        %v341 = vsub.f32 %v329, %v335
        %v342 = vsub.f32 %v330, %v337
        %v343 = vsub.f32 %v331, %v339
        %v344 = vmul.f32 %v340, 1.442695
        %v345 = vpow.pop %v344
        %v346 = vmul.f32 %v341, 1.442695
        %v347 = vpow.pop %v346
        %v348 = vmul.f32 %v342, 1.442695
        %v349 = vpow.pop %v348
        %v350 = vmul.f32 %v343, 1.442695
        %v351 = vpow.pop %v350
        %352 = vadd.xlane.f32.xlu0 %v345
        %v353 = vpop.xlane.xlu0 %352
        %354 = vadd.xlane.f32.xlu0 %v347
        %v355 = vpop.xlane.xlu0 %354
        %356 = vadd.xlane.f32.xlu0 %v349
        %v357 = vpop.xlane.xlu0 %356
        %358 = vadd.xlane.f32.xlu0 %v351
        %v359 = vpop.xlane.xlu0 %358
        %v360 = vrcp.pop %v353
        %v361 = vrcp.pop %v355
        %v362 = vrcp.pop %v357
        %v363 = vrcp.pop %v359
        %v364 = vmul.f32 %v353, %v360
        %v365 = vmul.f32 %v355, %v361
        %v366 = vmul.f32 %v357, %v362
        %v367 = vmul.f32 %v359, %v363
        %v368 = vsub.f32 2.0, %v364
        %v369 = vsub.f32 2.0, %v365
        %v370 = vsub.f32 2.0, %v366
        %v371 = vsub.f32 2.0, %v367
        %v372 = vmul.f32 %v360, %v368
        %v373 = vmul.f32 %v361, %v369
        %v374 = vmul.f32 %v362, %v370
        %v375 = vmul.f32 %v363, %v371
        %v376 = vmul.f32 %v345, %v372
        %v377 = vmul.f32 %v347, %v373
        %v378 = vmul.f32 %v349, %v374
        %v379 = vmul.f32 %v351, %v375
        %v380 = vadd.f32 %v323, %v376
        %v381 = vadd.f32 %v324, %v377
        %v382 = vadd.f32 %v325, %v378
        %v383 = vadd.f32 %v326, %v379
        %v384 = vmul.f32 %v380, 0.25
        %v385 = vmul.f32 %v381, 0.25
        %v386 = vmul.f32 %v382, 0.25
        %v387 = vmul.f32 %v383, 0.25
        %v388 = vadd.f32 %v384, 1e-12
        %v389 = vadd.f32 %v385, 1e-12
        %v390 = vadd.f32 %v386, 1e-12
        %v391 = vadd.f32 %v387, 1e-12
        %v392 = vlog2.pop %v388
        %v393 = vmul.f32 %v392, 0.6931472
        %v394 = vlog2.pop %v389
        %v395 = vmul.f32 %v394, 0.6931472
        %v396 = vlog2.pop %v390
        %v397 = vmul.f32 %v396, 0.6931472
        %v398 = vlog2.pop %v391
        %v399 = vmul.f32 %v398, 0.6931472
        %v400 = vmul.f32 %v384, %v393
        %v401 = vmul.f32 %v385, %v395
        %v402 = vmul.f32 %v386, %v397
        %v403 = vmul.f32 %v387, %v399
        %404 = vadd.xlane.f32.xlu0 %v400
        %v405 = vpop.xlane.xlu0 %404
        %406 = vadd.xlane.f32.xlu0 %v401
        %v407 = vpop.xlane.xlu0 %406
        %408 = vadd.xlane.f32.xlu0 %v402
        %v409 = vpop.xlane.xlu0 %408
        %410 = vadd.xlane.f32.xlu0 %v403
        %v411 = vpop.xlane.xlu0 %410
        %v412 = vsub.f32 0.0, %v405
        %v413 = vsub.f32 0.0, %v407
        %v414 = vsub.f32 0.0, %v409
        %v415 = vsub.f32 0.0, %v411
        %vm416 = vcmask 7168
        %v417 = vsel %vm416, %v412, 0.0
        %v418 = vsel %vm416, %v413, 0.0
        %v419 = vadd.f32 %v417, %v418
        %v420 = vsel %vm416, %v414, 0.0
        %v421 = vadd.f32 %v419, %v420
        %v422 = vsel %vm416, %v415, 0.0
        %v423 = vadd.f32 %v421, %v422
        %424 = vadd.xlane.f32.xlu0 %v423
        %v425 = vpop.xlane.xlu0 %424
        %v426 = vrot.slane %v425, 4
        %v427 = vadd.f32 %v425, %v426
        %v428 = vrot.slane %v427, 2
        %v429 = vadd.f32 %v427, %v428
        %v430 = vrot.slane %v429, 1
        %v431 = vadd.f32 %v429, %v430
        %s432 = vtos %v431
        %v433 = vstv %s432
        %434 = vst [vmem:[%s159] sm:$0xff] %v433
        %s435 = sand.u32 %s52, 1
        %s436 = scalar_lea.sflag [#allocation4], %s435
        %s437 = sand.u32 %s52, 1
        %s438 = smul.addr %s437, 8
        %s439 = scalar_lea.vmem [#allocation5], %s438
        // Predicated region
        $region29: #{tpu_custom_call.1} parent=23 // pred_check
          %p440 = pneg %p62
        $region30: #{tpu_custom_call.1} parent=23 // pred_check_branch
          %442 = sbr.rel (%p440) target = $region32
        $region31: #{tpu_custom_call.1} parent=23 // pred_region
          %s444 = ssub.s32 128, 128
          %445 = vsyncadd %s436, %s444
          %s446 = smul.addr %s18, 128
          %s447 = scalar_lea.hbm %s1, %s446
          %s449 = sshll.u32 %s439, 4
          %s450 = int_to_ptr.vmem [resolvable:$true] %s449
          %452 = dma.vmem_to_hbm [thread:$0]  %s450, 128, %s447, %s436
        $region32: #{tpu_custom_call.1} parent=23 // pred_fallthru
          _
      $region24: #{tpu_custom_call.1} parent=5 // pred_fallthru
        _
      %p453 = scmp.le.s32.totalorder 2, %s13
      // Predicated region
      $region33: #{tpu_custom_call.1} parent=5 // pred_check
        %p454 = pneg %p453
      $region34: #{tpu_custom_call.1} parent=5 // pred_check_branch
        %456 = sbr.rel (%p454) target = $region36
      $region35: #{tpu_custom_call.1} parent=5 // pred_region
        %s457 = ssub.s32 %s13, 2
        // Predicated region
        $region37: #{tpu_custom_call.1} parent=35 // pred_check
          %p458 = pneg %p68
        $region38: #{tpu_custom_call.1} parent=35 // pred_check_branch
          %460 = sbr.rel (%p458) target = $region40
        $region39: #{tpu_custom_call.1} parent=35 // pred_region
          %s461 = sand.u32 %s53, 1
          %s462 = scalar_lea.sflag [#allocation4], %s461
          %s463 = sand.u32 %s53, 1
          %s464 = smul.addr %s463, 8
          %s465 = scalar_lea.vmem [#allocation5], %s464
          %466 = dma.done %s462, 128
        $region40: #{tpu_custom_call.1} parent=35 // pred_fallthru
          _
      $region36: #{tpu_custom_call.1} parent=5 // pred_fallthru
        _
    $region6: #{tpu_custom_call.1} parent=1 // loop_footer
      %s17 = sadd.s32 1, %s13
    $region7: #{tpu_custom_call.1} parent=1 // loop_footer_branch
      %12 = sbr.rel target = $region3
    $region8: #{tpu_custom_call.1} parent=1 // loop_exit
      _
    %467 = vsyncpa [#allocation3], 1
    %s468 = scalar_lea.sflag [#allocation3], 1
    %469 = vsyncpa %s468, 1
    %470 = vsyncpa [#allocation4], 1
    %s471 = scalar_lea.sflag [#allocation4], 1
    %472 = vsyncpa %s471, 1

</llo_original>
